<compile_context>
chip_gen: v7x
topology: tpu7x:2x2x1
jax: 0.10.0
libtpu: 0.0.40
codegen_flags: <defaults>
</compile_context>

<pallas_src>
import functools

import jax
import jax.numpy as jnp
from jax.experimental import pallas as pl
from jax.experimental.pallas import tpu as pltpu

_LANE = 128
_MAX_BLOCK_ROWS = 8192     # (8192, 128) f32 = 4 MiB per stream per pipeline buffer
_FOLD_ROWS = 32            # accumulator rows -> 4 independent 8-sublane add chains
_NUM_CORES = 2             # leading "parallel" grid axis (used by v7x megacore)


def _sl1_kernel(*refs, mask_mode, track_count, need_row_mask,
                block_rows, fold_rows, steps_per_core, n_rows):
    """Accumulate SmoothL1 sum (and selected-element count) into per-core out blocks.

    refs = (pred_ref, gt_ref[, mask_ref], sum_ref[, cnt_ref])
    """
    if mask_mode == "explicit":
        pred_ref, gt_ref, mask_ref = refs[:3]
        out_refs = refs[3:]
    else:
        pred_ref, gt_ref = refs[:2]
        mask_ref = None
        out_refs = refs[2:]
    if track_count:
        sum_ref, cnt_ref = out_refs
    else:
        (sum_ref,) = out_refs
        cnt_ref = None

    i = pl.program_id(1)

    @pl.when(i == 0)
    def _():
        sum_ref[...] = jnp.zeros_like(sum_ref)
        if track_count:
            cnt_ref[...] = jnp.zeros_like(cnt_ref)

    pred = pred_ref[...].astype(jnp.float32)
    gt = gt_ref[...].astype(jnp.float32)

    diff = pred - gt
    adiff = jnp.abs(diff)
    # SmoothL1 (beta=1), clipped form: min(|d|,1) * (|d| - 0.5*min(|d|,1)).
    clip = jnp.minimum(adiff, 1.0)
    elem = clip * (adiff - 0.5 * clip)

    # Selection mask.  Lane padding (numel % 128 != 0) is zero-padded, so it is
    # excluded for free: gt>0 is False / mask==0 / diff==0 in the respective modes.
    if mask_mode == "gt_positive":
        m = gt > 0.0
    elif mask_mode == "explicit":
        m = mask_ref[...] != 0
    else:  # "all"
        m = None

    if need_row_mask:
        # Ragged tail block (garbage rows from the edge DMA) and padded grid steps
        # (clamped index_map re-reading the last block) are excluded by a row-only
        # compare against the logical flat row index.  Row index < numel/128, so no
        # int32 overflow risk.
        gi = pl.program_id(0) * steps_per_core + i            # logical block index
        row = (jax.lax.broadcasted_iota(jnp.int32, (block_rows, 1), 0)
               + gi * block_rows)
        row_ok = row < n_rows
        m = row_ok if m is None else jnp.logical_and(m, row_ok)

    if m is not None:
        # where-select (NOT multiply) so NaN/Inf garbage in tail rows never propagates.
        elem = jnp.where(m, elem, 0.0)

    # Fold (block_rows, 128) into the (fold_rows, 128) resident output accumulator
    # with pure VPU adds; cross-lane reduction happens once, in JAX, on the partials.
    folds = block_rows // fold_rows
    sum_ref[...] += elem.reshape(folds, fold_rows, _LANE).sum(axis=0)
    if track_count:
        cnt = m.astype(jnp.float32)
        cnt_ref[...] += cnt.reshape(folds, fold_rows, _LANE).sum(axis=0)


def _prep_stream(x, pad_len):
    """Flatten to (rows, 128).  Keep f32/bf16 as-is (upcast in-kernel)."""
    if not (x.dtype == jnp.float32 or x.dtype == jnp.bfloat16):
        x = x.astype(jnp.float32)
    flat = x.reshape(-1)
    if flat.shape[0] != pad_len:
        # <128-element zero pad; padded lanes are excluded inside the kernel.
        flat = jnp.pad(flat, (0, pad_len - flat.shape[0]))
    return flat.reshape(pad_len // _LANE, _LANE)


def _prep_mask(mask, pad_len):
    """Stream an explicit mask as int8 (1 B/elem instead of 4)."""
    flat = mask.reshape(-1).astype(jnp.int8)
    if flat.shape[0] != pad_len:
        flat = jnp.pad(flat, (0, pad_len - flat.shape[0]))
    return flat.reshape(pad_len // _LANE, _LANE)


@functools.partial(jax.jit, static_argnames=("use_mask", "max_block_rows"))
def sl1_loss(depth_pred, depth_gt, mask=None, use_mask=True,
             max_block_rows=_MAX_BLOCK_ROWS):
    n = depth_pred.size                       # static under jit
    pad_len = pl.cdiv(n, _LANE) * _LANE
    rows = pad_len // _LANE

    block_rows = min(max_block_rows, rows)
    if block_rows % _FOLD_ROWS == 0:
        fold_rows = _FOLD_ROWS
    elif block_rows % 8 == 0:
        fold_rows = 8
    else:
        fold_rows = block_rows

    total_blocks = pl.cdiv(rows, block_rows)
    num_cores = min(_NUM_CORES, total_blocks)
    steps_per_core = pl.cdiv(total_blocks, num_cores)
    grid = (num_cores, steps_per_core)

    # Validity math only emitted when there is a ragged tail block or a padded
    # (clamped) grid step from the per-core split.
    need_row_mask = (rows % block_rows != 0) or (num_cores * steps_per_core != total_blocks)

    pred2d = _prep_stream(depth_pred, pad_len)
    gt2d = _prep_stream(depth_gt, pad_len)

    if mask is not None:
        mask_mode = "explicit"
        inputs = (pred2d, gt2d, _prep_mask(mask, pad_len))
    elif use_mask:
        mask_mode = "gt_positive"             # default: mask computed in-kernel
        inputs = (pred2d, gt2d)
    else:
        mask_mode = "all"
        inputs = (pred2d, gt2d)
    track_count = mask_mode != "all"          # "all" divides by n, no count stream

    def in_map(c, i):
        # Clamp so padded grid steps stay in-bounds; they are masked out in-kernel.
        return (jnp.minimum(c * steps_per_core + i, total_blocks - 1), 0)

    in_specs = [pl.BlockSpec((block_rows, _LANE), in_map) for _ in inputs]

    out_shapes = [jax.ShapeDtypeStruct((num_cores, fold_rows, _LANE), jnp.float32)]
    out_specs = [pl.BlockSpec((None, fold_rows, _LANE), lambda c, i: (c, 0, 0))]
    if track_count:
        out_shapes.append(jax.ShapeDtypeStruct((num_cores, fold_rows, _LANE), jnp.float32))
        out_specs.append(pl.BlockSpec((None, fold_rows, _LANE), lambda c, i: (c, 0, 0)))

    # VMEM budget: double-buffered input streams + per-core partial outputs + headroom.
    stream_bytes = sum(block_rows * _LANE * x.dtype.itemsize for x in inputs)
    out_bytes = len(out_shapes) * fold_rows * _LANE * 4
    vmem_limit = int(2 * stream_bytes + 2 * out_bytes + (8 << 20))

    kernel = functools.partial(
        _sl1_kernel,
        mask_mode=mask_mode,
        track_count=track_count,
        need_row_mask=need_row_mask,
        block_rows=block_rows,
        fold_rows=fold_rows,
        steps_per_core=steps_per_core,
        n_rows=rows,
    )

    outs = pl.pallas_call(
        kernel,
        out_shape=tuple(out_shapes),
        grid_spec=pltpu.PrefetchScalarGridSpec(
            num_scalar_prefetch=0,
            grid=grid,
            in_specs=in_specs,
            out_specs=tuple(out_specs),
        ),
        compiler_params=pltpu.CompilerParams(
            dimension_semantics=("parallel", "arbitrary"),
            vmem_limit_bytes=vmem_limit,
        ),
    )(*inputs)

    if not isinstance(outs, (tuple, list)):
        outs = (outs,)

    total_sum = jnp.sum(outs[0])
    if track_count:
        total_cnt = jnp.sum(outs[1])
    else:
        total_cnt = jnp.float32(n)
    # NaN (0/0) when no element is selected - matches SmoothL1Loss over an empty set.
    return total_sum / total_cnt


def _reference(depth_pred, depth_gt, mask=None, use_mask=True):
    """Pure-JAX reference of SL1Loss.forward."""
    p = depth_pred.astype(jnp.float32)
    g = depth_gt.astype(jnp.float32)
    if mask is None and use_mask:
        m = g > 0.0
    elif mask is not None:
        m = mask.astype(bool)
    else:
        m = jnp.ones_like(g, dtype=bool)
    diff = p - g
    adiff = jnp.abs(diff)
    elem = jnp.where(adiff < 1.0, 0.5 * diff * diff, adiff - 0.5)
    return jnp.sum(jnp.where(m, elem, 0.0)) / jnp.sum(m.astype(jnp.float32))


if __name__ == "__main__":
    key = jax.random.PRNGKey(0)
    k1, k2, k3, k4, k5, k6 = jax.random.split(key, 6)

    # Test 1: small depth maps (batch=2, spatial=16x16), numel % 128 == 0, single block.
    depth_gt = jnp.maximum(jax.random.normal(k1, (2, 16, 16), jnp.float32), 0.0)
    depth_pred = depth_gt + 0.7 * jax.random.normal(k2, (2, 16, 16), jnp.float32)
    loss = sl1_loss(depth_pred, depth_gt)
    jax.block_until_ready(loss)
    ref = _reference(depth_pred, depth_gt)
    assert jnp.allclose(loss, ref, rtol=1e-5, atol=1e-6), (loss, ref)

    # Test 2: awkward size (numel % 128 != 0) with a small block size to force a
    # multi-block grid, the dual-core split, and the ragged tail block.
    depth_gt2 = jnp.maximum(jax.random.normal(k3, (4, 123, 321), jnp.float32), 0.0)
    depth_pred2 = depth_gt2 + 0.5 * jax.random.normal(k4, (4, 123, 321), jnp.float32)
    loss2 = sl1_loss(depth_pred2, depth_gt2, max_block_rows=64)
    jax.block_until_ready(loss2)
    ref2 = _reference(depth_pred2, depth_gt2)
    assert jnp.allclose(loss2, ref2, rtol=1e-5, atol=1e-6), (loss2, ref2)

    # Test 3: odd number of blocks -> padded (clamped) grid step on the parallel split.
    depth_gt3 = jnp.maximum(jax.random.normal(k5, (3, 8, 128), jnp.float32), 0.0)
    depth_pred3 = depth_gt3 + 0.5 * jax.random.normal(k6, (3, 8, 128), jnp.float32)
    loss3 = sl1_loss(depth_pred3, depth_gt3, max_block_rows=8)
    jax.block_until_ready(loss3)
    ref3 = _reference(depth_pred3, depth_gt3)
    assert jnp.allclose(loss3, ref3, rtol=1e-5, atol=1e-6), (loss3, ref3)

    # Test 4: explicit mask (streamed as int8) on the multi-block path.
    mask2 = depth_gt2 > 0.5
    loss4 = sl1_loss(depth_pred2, depth_gt2, mask=mask2, max_block_rows=64)
    jax.block_until_ready(loss4)
    ref4 = _reference(depth_pred2, depth_gt2, mask=mask2)
    assert jnp.allclose(loss4, ref4, rtol=1e-5, atol=1e-6), (loss4, ref4)

    # Test 5: useMask=False ("all" mode, no count stream, divide by n).
    loss5 = sl1_loss(depth_pred2, depth_gt2, use_mask=False)
    jax.block_until_ready(loss5)
    ref5 = _reference(depth_pred2, depth_gt2, use_mask=False)
    assert jnp.allclose(loss5, ref5, rtol=1e-5, atol=1e-6), (loss5, ref5)

    # Test 6: bf16 streaming path (halves HBM bytes; compute still f32 in-kernel).
    loss6 = sl1_loss(depth_pred.astype(jnp.bfloat16), depth_gt.astype(jnp.bfloat16))
    jax.block_until_ready(loss6)
    ref6 = _reference(depth_pred.astype(jnp.bfloat16), depth_gt.astype(jnp.bfloat16))
    assert jnp.allclose(loss6, ref6, rtol=1e-4, atol=1e-6), (loss6, ref6)

    print("KERNEL_OK")
</pallas_src>

<mosaic_0001>
module attributes {stable_mosaic.version = 11 : i64} {
  func.func @_sl1_kernel(%arg0: i32, %arg1: i32, %arg2: memref<4x128xf32, #tpu.memory_space<vmem>>, %arg3: memref<4x128xf32, #tpu.memory_space<vmem>>, %arg4: memref<1x4x128xf32, #tpu.memory_space<vmem>>, %arg5: memref<1x4x128xf32, #tpu.memory_space<vmem>>) attributes {dimension_semantics = [#tpu.dimension_semantics<parallel>, #tpu.dimension_semantics<arbitrary>], iteration_bounds = array<i64: 1, 1>, scalar_prefetch = 0 : i64, scratch_operands = 0 : i64, tpu.core_type = #tpu.core_type<tc>, window_params = [{transform_indices = @transform_0, window_bounds = array<i64: 4, 128>}, {transform_indices = @transform_1, window_bounds = array<i64: 4, 128>}, {transform_indices = @transform_2, window_bounds = array<i64: 1, 4, 128>}, {transform_indices = @transform_3, window_bounds = array<i64: 1, 4, 128>}]} {
    %c0_i32 = arith.constant 0 : i32
    %0 = arith.cmpi eq, %arg1, %c0_i32 : i32
    %1 = arith.extui %0 : i1 to i32
    %c0_i32_0 = arith.constant 0 : i32
    %2 = arith.cmpi ne, %1, %c0_i32_0 : i32
    scf.if %2 {
      %cst_21 = arith.constant 0.000000e+00 : f32
      %35 = vector.broadcast %cst_21 : f32 to vector<4x128xf32>
      %c0_22 = arith.constant 0 : index
      %c0_23 = arith.constant 0 : index
      %c0_24 = arith.constant 0 : index
      %36 = vector.load %arg4[%c0_22, %c0_23, %c0_24] : memref<1x4x128xf32, #tpu.memory_space<vmem>>, vector<1x4x128xf32>
      %37 = vector.shape_cast %36 : vector<1x4x128xf32> to vector<4x128xf32>
      %38 = vector.shape_cast %35 : vector<4x128xf32> to vector<1x4x128xf32>
      tpu.vector_store %arg4[%c0_22, %c0_23, %c0_24], %38 {strides = array<i32>} : memref<1x4x128xf32, #tpu.memory_space<vmem>>, vector<1x4x128xf32>,
      %cst_25 = arith.constant 0.000000e+00 : f32
      %39 = vector.broadcast %cst_25 : f32 to vector<4x128xf32>
      %c0_26 = arith.constant 0 : index
      %c0_27 = arith.constant 0 : index
      %c0_28 = arith.constant 0 : index
      %40 = vector.load %arg5[%c0_26, %c0_27, %c0_28] : memref<1x4x128xf32, #tpu.memory_space<vmem>>, vector<1x4x128xf32>
      %41 = vector.shape_cast %40 : vector<1x4x128xf32> to vector<4x128xf32>
      %42 = vector.shape_cast %39 : vector<4x128xf32> to vector<1x4x128xf32>
      tpu.vector_store %arg5[%c0_26, %c0_27, %c0_28], %42 {strides = array<i32>} : memref<1x4x128xf32, #tpu.memory_space<vmem>>, vector<1x4x128xf32>,
    } else {
    }
    %c0 = arith.constant 0 : index
    %c0_1 = arith.constant 0 : index
    %3 = vector.load %arg2[%c0, %c0_1] : memref<4x128xf32, #tpu.memory_space<vmem>>, vector<4x128xf32>
    %c0_2 = arith.constant 0 : index
    %c0_3 = arith.constant 0 : index
    %4 = vector.load %arg3[%c0_2, %c0_3] : memref<4x128xf32, #tpu.memory_space<vmem>>, vector<4x128xf32>
    %5 = arith.subf %3, %4 : vector<4x128xf32>
    %6 = math.absf %5 : vector<4x128xf32>
    %cst = arith.constant 1.000000e+00 : f32
    %7 = vector.broadcast %cst : f32 to vector<4x128xf32>
    %8 = arith.minimumf %6, %7 : vector<4x128xf32>
    %cst_4 = arith.constant 5.000000e-01 : f32
    %9 = vector.broadcast %cst_4 : f32 to vector<4x128xf32>
    %10 = arith.mulf %9, %8 : vector<4x128xf32>
    %11 = arith.subf %6, %10 : vector<4x128xf32>
    %12 = arith.mulf %8, %11 : vector<4x128xf32>
    %cst_5 = arith.constant 0.000000e+00 : f32
    %13 = vector.broadcast %cst_5 : f32 to vector<4x128xf32>
    %14 = arith.cmpf ogt, %4, %13 : vector<4x128xf32>
    %cst_6 = arith.constant 0.000000e+00 : f32
    %15 = vector.broadcast %cst_6 : f32 to vector<4x128xf32>
    %16 = arith.select %14, %12, %15 : vector<4x128xi1>, vector<4x128xf32>
    %c0_7 = arith.constant 0 : index
    %c0_8 = arith.constant 0 : index
    %c0_9 = arith.constant 0 : index
    %17 = vector.load %arg4[%c0_7, %c0_8, %c0_9] : memref<1x4x128xf32, #tpu.memory_space<vmem>>, vector<1x4x128xf32>
    %18 = vector.shape_cast %17 : vector<1x4x128xf32> to vector<4x128xf32>
    %19 = vector.shape_cast %16 : vector<4x128xf32> to vector<1x4x128xf32>
    %cst_10 = arith.constant dense<0.000000e+00> : vector<4x128xf32>
    %20 = vector.multi_reduction <add>, %19, %cst_10 [0] : vector<1x4x128xf32> to vector<4x128xf32>
    %21 = arith.addf %18, %20 : vector<4x128xf32>
    %c0_11 = arith.constant 0 : index
    %c0_12 = arith.constant 0 : index
    %c0_13 = arith.constant 0 : index
    %22 = vector.load %arg4[%c0_11, %c0_12, %c0_13] : memref<1x4x128xf32, #tpu.memory_space<vmem>>, vector<1x4x128xf32>
    %23 = vector.shape_cast %22 : vector<1x4x128xf32> to vector<4x128xf32>
    %24 = vector.shape_cast %21 : vector<4x128xf32> to vector<1x4x128xf32>
    tpu.vector_store %arg4[%c0_11, %c0_12, %c0_13], %24 {strides = array<i32>} : memref<1x4x128xf32, #tpu.memory_space<vmem>>, vector<1x4x128xf32>,
    %25 = arith.extui %14 : vector<4x128xi1> to vector<4x128xi32>
    %26 = arith.sitofp %25 : vector<4x128xi32> to vector<4x128xf32>
    %c0_14 = arith.constant 0 : index
    %c0_15 = arith.constant 0 : index
    %c0_16 = arith.constant 0 : index
    %27 = vector.load %arg5[%c0_14, %c0_15, %c0_16] : memref<1x4x128xf32, #tpu.memory_space<vmem>>, vector<1x4x128xf32>
    %28 = vector.shape_cast %27 : vector<1x4x128xf32> to vector<4x128xf32>
    %29 = vector.shape_cast %26 : vector<4x128xf32> to vector<1x4x128xf32>
    %cst_17 = arith.constant dense<0.000000e+00> : vector<4x128xf32>
    %30 = vector.multi_reduction <add>, %29, %cst_17 [0] : vector<1x4x128xf32> to vector<4x128xf32>
    %31 = arith.addf %28, %30 : vector<4x128xf32>
    %c0_18 = arith.constant 0 : index
    %c0_19 = arith.constant 0 : index
    %c0_20 = arith.constant 0 : index
    %32 = vector.load %arg5[%c0_18, %c0_19, %c0_20] : memref<1x4x128xf32, #tpu.memory_space<vmem>>, vector<1x4x128xf32>
    %33 = vector.shape_cast %32 : vector<1x4x128xf32> to vector<4x128xf32>
    %34 = vector.shape_cast %31 : vector<4x128xf32> to vector<1x4x128xf32>
    tpu.vector_store %arg5[%c0_18, %c0_19, %c0_20], %34 {strides = array<i32>} : memref<1x4x128xf32, #tpu.memory_space<vmem>>, vector<1x4x128xf32>,
    return
  }
  func.func @transform_0(%arg0: i32, %arg1: i32) -> (i32, i32) {
    %c1_i32 = arith.constant 1 : i32
    %0 = arith.muli %arg0, %c1_i32 : i32
    %1 = arith.addi %0, %arg1 : i32
    %c0_i32 = arith.constant 0 : i32
    %2 = arith.minsi %1, %c0_i32 : i32
    %c0_i32_0 = arith.constant 0 : i32
    %c0_i32_1 = arith.constant 0 : i32
    return %2, %c0_i32_0 : i32, i32
  }
  func.func @transform_1(%arg0: i32, %arg1: i32) -> (i32, i32) {
    %c1_i32 = arith.constant 1 : i32
    %0 = arith.muli %arg0, %c1_i32 : i32
    %1 = arith.addi %0, %arg1 : i32
    %c0_i32 = arith.constant 0 : i32
    %2 = arith.minsi %1, %c0_i32 : i32
    %c0_i32_0 = arith.constant 0 : i32
    %c0_i32_1 = arith.constant 0 : i32
    return %2, %c0_i32_0 : i32, i32
  }
  func.func @transform_2(%arg0: i32, %arg1: i32) -> (i32, i32, i32) {
    %c0_i32 = arith.constant 0 : i32
    %c0_i32_0 = arith.constant 0 : i32
    %c0_i32_1 = arith.constant 0 : i32
    return %arg0, %c0_i32, %c0_i32_0 : i32, i32, i32
  }
  func.func @transform_3(%arg0: i32, %arg1: i32) -> (i32, i32, i32) {
    %c0_i32 = arith.constant 0 : i32
    %c0_i32_0 = arith.constant 0 : i32
    %c0_i32_1 = arith.constant 0 : i32
    return %arg0, %c0_i32, %c0_i32_0 : i32, i32, i32
  }
}

</mosaic_0001>

<llo_original>
// kernel: sl1_loss.1
$region0: #{sl1_loss.1}
  #allocation0 [shape = 'u32[]', space=smem, size = 0x4, offset = 0x4, fixed_abs, tag = 'smem constant byte address 0x4 - core index']
  #allocation1 [shape = 'u32[144,128]{1,0:T(1,128)}', space=vmem, size = 0x12000, scoped, tag = 'internal scratch']
  %s0 = inlined_call_operand.vmem [shape: f32[4,128], index: 0, kind: input, shape index: {}]
  %s1 = inlined_call_operand.vmem [shape: f32[4,128], index: 1, kind: input, shape index: {}]
  %s2 = inlined_call_operand.vmem [shape: f32[1,4,128], index: 2, kind: output, shape index: {0}]
  %s3 = inlined_call_operand.vmem [shape: f32[1,4,128], index: 3, kind: output, shape index: {1}]
  %4 = xla_tuple %s2, %s3
  %s5 = sld [smem:[#allocation0]]
  $region30: #{sl1_loss.1} parent=0
    _
  %s7 = ssub.s32 1, %s5
  %s8 = scalar_select 0, %s7, %s5
  // Predicated region
  $region2: #{sl1_loss.1} parent=0 // pred_check
    _
  $region3: #{sl1_loss.1} parent=0 // pred_check_branch
    %10 = sbr.rel (0) target = $region5
  $region4: #{sl1_loss.1} parent=0 // pred_region
    %s11 = sadd.s32 0, 0
    %p12 = scmp.lt.s32.totalorder %s11, 0
    %s13 = scalar_select %p12, %s11, 0
    %p14 = scmp.lt.s32.totalorder %s13, 0
    %s15 = scalar_select %p14, %s13, 0
    %s16 = smul.addr %s15, 4
    %s17 = scalar_lea.vmem %s0, %s16
    %s18 = sadd.s32 0, 0
    %p19 = scmp.lt.s32.totalorder %s18, 0
    %s20 = scalar_select %p19, %s18, 0
  $region5: #{sl1_loss.1} parent=0 // pred_fallthru
    _
  // Predicated region
  $region6: #{sl1_loss.1} parent=0 // pred_check
    _
  $region7: #{sl1_loss.1} parent=0 // pred_check_branch
    %22 = sbr.rel (0) target = $region9
  $region8: #{sl1_loss.1} parent=0 // pred_region
    %s23 = sadd.s32 0, 0
    %p24 = scmp.lt.s32.totalorder %s23, 0
    %s25 = scalar_select %p24, %s23, 0
    %p26 = scmp.lt.s32.totalorder %s25, 0
    %s27 = scalar_select %p26, %s25, 0
    %s28 = smul.addr %s27, 4
    %s29 = scalar_lea.vmem %s1, %s28
    %s30 = sadd.s32 0, 0
    %p31 = scmp.lt.s32.totalorder %s30, 0
    %s32 = scalar_select %p31, %s30, 0
  $region9: #{sl1_loss.1} parent=0 // pred_fallthru
    _
  %s33 = sadd.s32 0, 0
  %p34 = scmp.lt.s32.totalorder %s33, 0
  %s35 = scalar_select %p34, %s33, 0
  %p36 = scmp.lt.s32.totalorder %s35, 0
  %s37 = scalar_select %p36, %s35, 0
  %s38 = smul.addr %s37, 4
  %s39 = scalar_lea.vmem %s0, %s38
  %s40 = sadd.s32 0, 0
  %p41 = scmp.lt.s32.totalorder %s40, 0
  %s42 = scalar_select %p41, %s40, 0
  %p43 = scmp.lt.s32.totalorder %s42, 0
  %s44 = scalar_select %p43, %s42, 0
  %s45 = smul.addr %s44, 4
  %s46 = scalar_lea.vmem %s1, %s45
  %s47 = sadd.s32 0, 0
  %p48 = scmp.lt.s32.totalorder %s47, 0
  %s49 = scalar_select %p48, %s47, 0
  %p50 = scmp.lt.s32.totalorder %s49, 0
  %s51 = scalar_select %p50, %s49, 0
  %s52 = smul.addr %s51, 4
  %s53 = scalar_lea.vmem %s0, %s52
  %s54 = sadd.s32 0, 0
  %p55 = scmp.lt.s32.totalorder %s54, 0
  %s56 = scalar_select %p55, %s54, 0
  %s57 = sadd.s32 0, 0
  %p58 = scmp.lt.s32.totalorder %s57, 0
  %s59 = scalar_select %p58, %s57, 0
  %p60 = scmp.lt.s32.totalorder %s59, 0
  %s61 = scalar_select %p60, %s59, 0
  %s62 = smul.addr %s61, 4
  %s63 = scalar_lea.vmem %s1, %s62
  %s64 = sadd.s32 0, 0
  %p65 = scmp.lt.s32.totalorder %s64, 0
  %s66 = scalar_select %p65, %s64, 0
  %p67 = scmp.eq.s32.totalorder 0, 0
  // Predicated region
  $region10: #{sl1_loss.1} parent=0 // pred_check
    %p68 = pneg %p67
  $region11: #{sl1_loss.1} parent=0 // pred_check_branch
    %70 = sbr.rel (%p68) target = $region13
  $region12: #{sl1_loss.1} parent=0 // pred_region
    %71 = vst [vmem:[%s2] sm:$0xf] 0.0
    %72 = vst [vmem:[%s3] sm:$0xf] 0.0
  $region13: #{sl1_loss.1} parent=0 // pred_fallthru
    _
  %v73 = vld [vmem:[%s53] sm:$0xf]
  %v74 = vld [vmem:[%s63] sm:$0xf]
  %v75 = vsub.f32 %v73, %v74
  %v76 = vand.u32 2147483647, %v75
  %v77 = vmin.f32 %v76, 1.0
  %v78 = vmul.f32 %v77, 0.5
  %v79 = vsub.f32 %v76, %v78
  %v80 = vmul.f32 %v77, %v79
  %vm81 = vcmp.gt.f32.partialorder %v74, 0.0
  %v82 = vsel %vm81, %v80, 0.0
  %v83 = vld [vmem:[%s2] sm:$0xf]
  %v84 = vadd.f32 %v82, 0.0
  %v85 = vadd.f32 %v83, %v84
  %86 = vst [vmem:[%s2] sm:$0xf] %v85
  %v87 = vsel %vm81, 1, 0
  %v88 = vcvt.s32.f32 %v87
  %v89 = vld [vmem:[%s3] sm:$0xf]
  %v90 = vadd.f32 %v88, 0.0
  %v91 = vadd.f32 %v89, %v90
  %92 = vst [vmem:[%s3] sm:$0xf] %v91
  // Predicated region
  $region14: #{sl1_loss.1} parent=0 // pred_check
    _
  $region15: #{sl1_loss.1} parent=0 // pred_check_branch
    %94 = sbr.rel (0) target = $region17
  $region16: #{sl1_loss.1} parent=0 // pred_region
    _
  $region17: #{sl1_loss.1} parent=0 // pred_fallthru
    _
  // Predicated region
  $region18: #{sl1_loss.1} parent=0 // pred_check
    _
  $region19: #{sl1_loss.1} parent=0 // pred_check_branch
    %96 = sbr.rel (0) target = $region21
  $region20: #{sl1_loss.1} parent=0 // pred_region
    _
  $region21: #{sl1_loss.1} parent=0 // pred_fallthru
    _
  // Predicated region
  $region22: #{sl1_loss.1} parent=0 // pred_check
    _
  $region23: #{sl1_loss.1} parent=0 // pred_check_branch
    %98 = sbr.rel (0) target = $region25
  $region24: #{sl1_loss.1} parent=0 // pred_region
    _
  $region25: #{sl1_loss.1} parent=0 // pred_fallthru
    _
  // Predicated region
  $region26: #{sl1_loss.1} parent=0 // pred_check
    _
  $region27: #{sl1_loss.1} parent=0 // pred_check_branch
    %100 = sbr.rel (0) target = $region29
  $region28: #{sl1_loss.1} parent=0 // pred_region
    _
  $region29: #{sl1_loss.1} parent=0 // pred_fallthru
    _

</llo_original>
